<compile_context>
chip_gen: v6e
topology: v6e:2x2x1
jax: 0.10.0
libtpu: 0.0.40
codegen_flags: <defaults>
</compile_context>

<pallas_src>
import functools

import jax
import jax.numpy as jnp
from jax.experimental import pallas as pl
from jax.experimental.pallas import tpu as pltpu

_LANE = 128
_SUBLANE = 8


def _round_up(x, m):
    return (x + m - 1) // m * m


def _mlp3_kernel(x_ref, w1_ref, b1_ref, w2_ref, b2_ref, w3_ref, b3_ref, o_ref):
    # Reads hoisted once per tile (no in-kernel loop, but keeps it safe if one
    # is added later -- JAX does not CSE broadcast_in_dim inside loops).
    x = x_ref[...]
    w1 = w1_ref[...]
    w2 = w2_ref[...]
    w3 = w3_ref[...]
    b1 = b1_ref[...]
    b2 = b2_ref[...]
    b3 = b3_ref[...]

    # Layer 1: Linear + ReLU.  MXU matmul with f32 accumulation; bias add and
    # ReLU stay f32 (clean VPU path on v5e as well).
    h1 = jnp.dot(x, w1, preferred_element_type=jnp.float32) + b1
    h1 = jnp.maximum(h1, 0.0)

    # Layer 2: Linear + ReLU.
    h2 = jnp.dot(h1.astype(w2.dtype), w2, preferred_element_type=jnp.float32) + b2
    h2 = jnp.maximum(h2, 0.0)

    # Layer 3: Linear (no activation).
    out = jnp.dot(h2.astype(w3.dtype), w3, preferred_element_type=jnp.float32) + b3
    o_ref[...] = out.astype(o_ref.dtype)


def prepare_params(params, compute_dtype=jnp.bfloat16):
    """Pad/cast parameters ONCE; cache and reuse the result across calls.

    params: w1 [in,H], b1 [H], w2 [H,H], b2 [H], w3 [H,out], b3 [out]
            (weights pre-transposed to [in, out] so the hot path is x @ W + b).
    Only the hidden dim H is lane-padded to a multiple of 128; the input K dim
    (in_dim) and output N dim (out_dim) are left unpadded (full-dim blocks).
    Zero padding is exact through bias-add and ReLU.
    compute_dtype: matmul-operand dtype; bfloat16 is MXU-native (and a win) on
                   v5e, v6e and v7x.  Use float32 for an exact f32 reference
                   match.  Accumulation and biases are always f32.
    """
    in_dim, H = params["w1"].shape
    out_dim = params["w3"].shape[1]
    h_p = _round_up(H, _LANE)

    def pad2(a, rows, cols):
        a = jnp.asarray(a, jnp.float32)
        return jnp.pad(a, ((0, rows - a.shape[0]), (0, cols - a.shape[1])))

    return {
        "w1": pad2(params["w1"], in_dim, h_p).astype(compute_dtype),
        "b1": pad2(jnp.reshape(params["b1"], (1, H)), 1, h_p),        # f32
        "w2": pad2(params["w2"], h_p, h_p).astype(compute_dtype),
        "b2": pad2(jnp.reshape(params["b2"], (1, H)), 1, h_p),        # f32
        "w3": pad2(params["w3"], h_p, out_dim).astype(compute_dtype),
        "b3": jnp.asarray(params["b3"], jnp.float32).reshape(1, out_dim),
    }


@functools.partial(jax.jit, static_argnames=("block_rows", "num_cores"))
def feed_forward_nn_3(obs, prepared, block_rows=2048, num_cores=2):
    """Forward pass of FeedForwardNN_3.

    obs: [B, in_dim] or [in_dim] float32 (1-D inputs are unsqueezed like the
         PyTorch module does).
    prepared: output of prepare_params() (padded/cast once, cached by caller).
    block_rows: max batch-tile rows per grid step (multiple of 8).
    num_cores: target minimum number of batch tiles so the "parallel" grid axis
               can shard across v7x's two TensorCores (harmless on v5e/v6e).
    """
    obs = jnp.asarray(obs, dtype=jnp.float32)
    if obs.ndim == 1:
        obs = obs[None, :]
    B, in_dim = obs.shape

    w1, b1 = prepared["w1"], prepared["b1"]
    w2, b2 = prepared["w2"], prepared["b2"]
    w3, b3 = prepared["w3"], prepared["b3"]
    assert w1.shape[0] == in_dim, (w1.shape, in_dim)
    h_p = w1.shape[1]
    out_dim = w3.shape[1]
    compute_dtype = w1.dtype

    # Batch tiling: multiple of the sublane (8); at least `num_cores` tiles
    # when B is big enough; each tile capped at block_rows.
    b8 = _round_up(B, _SUBLANE)
    per_core = _round_up(pl.cdiv(b8, num_cores), _SUBLANE)
    tb = max(_SUBLANE, min(_round_up(block_rows, _SUBLANE), per_core))
    b_p = _round_up(B, tb)
    n_tiles = b_p // tb

    # Only the batch dim of obs is padded (to a whole number of tiles); the
    # feature dim stays at in_dim (no 8x lane-padding of the obs stream).
    x = jnp.pad(obs, ((0, b_p - B), (0, 0))).astype(compute_dtype)

    # Weights/biases: same block every grid step -> loaded once, VMEM-resident.
    resident = lambda shape: pl.BlockSpec(shape, lambda i: (0, 0))

    itemsz = jnp.dtype(compute_dtype).itemsize
    flops = 2 * b_p * (in_dim * h_p + h_p * h_p + h_p * out_dim)
    bytes_accessed = (
        x.size * itemsz
        + (w1.size + w2.size + w3.size) * itemsz
        + (b1.size + b2.size + b3.size) * 4
        + b_p * out_dim * 4
    )

    out_padded = pl.pallas_call(
        _mlp3_kernel,
        out_shape=jax.ShapeDtypeStruct((b_p, out_dim), jnp.float32),
        grid=(n_tiles,),
        in_specs=[
            pl.BlockSpec((tb, in_dim), lambda i: (i, 0)),  # obs tile, pipelined
            resident((in_dim, h_p)),
            resident((1, h_p)),
            resident((h_p, h_p)),
            resident((1, h_p)),
            resident((h_p, out_dim)),
            resident((1, out_dim)),
        ],
        out_specs=pl.BlockSpec((tb, out_dim), lambda i: (i, 0)),
        compiler_params=pltpu.CompilerParams(
            dimension_semantics=("parallel",),
            vmem_limit_bytes=32 * 1024 * 1024,
        ),
        cost_estimate=pl.CostEstimate(
            flops=flops, transcendentals=0, bytes_accessed=bytes_accessed
        ),
    )(x, w1, b1, w2, b2, w3, b3)

    return out_padded[:B]


def init_params(key, in_dim, out_dim, no_nodes):
    """Deterministic init matching nn.Linear's uniform(-1/sqrt(fan_in), 1/sqrt(fan_in)).
    Weights are stored pre-transposed as [in, out]."""
    ks = jax.random.split(key, 6)

    def linear(kw, kb, fan_in, fan_out):
        bound = 1.0 / jnp.sqrt(jnp.float32(fan_in))
        w = jax.random.uniform(kw, (fan_in, fan_out), jnp.float32, -bound, bound)
        b = jax.random.uniform(kb, (fan_out,), jnp.float32, -bound, bound)
        return w, b

    w1, b1 = linear(ks[0], ks[1], in_dim, no_nodes)
    w2, b2 = linear(ks[2], ks[3], no_nodes, no_nodes)
    w3, b3 = linear(ks[4], ks[5], no_nodes, out_dim)
    return {"w1": w1, "b1": b1, "w2": w2, "b2": b2, "w3": w3, "b3": b3}


def _reference(obs, p):
    h1 = jnp.maximum(obs @ p["w1"] + p["b1"], 0.0)
    h2 = jnp.maximum(h1 @ p["w2"] + p["b2"], 0.0)
    return h2 @ p["w3"] + p["b3"]


if __name__ == "__main__":
    key = jax.random.PRNGKey(0)
    in_dim, out_dim, no_nodes = 16, 8, 32

    k_obs, k_params, k_obs2 = jax.random.split(key, 3)
    params = init_params(k_params, in_dim, out_dim, no_nodes)

    # Pad/cast parameters once and reuse (steady-state calls do no param prep).
    prepared_f32 = prepare_params(params, compute_dtype=jnp.float32)
    prepared_bf16 = prepare_params(params)  # bf16 operands: default on all gens

    # Small batch, exact f32 path.
    obs = jax.random.normal(k_obs, (2, in_dim), dtype=jnp.float32)
    out = jax.block_until_ready(feed_forward_nn_3(obs, prepared_f32))
    ref = _reference(obs, params)
    assert out.shape == (2, out_dim), out.shape
    assert jnp.allclose(out, ref, atol=1e-5, rtol=1e-5), "mismatch vs reference (f32)"

    # 1-D input path (unsqueezed like the PyTorch module).
    out1d = jax.block_until_ready(feed_forward_nn_3(obs[0], prepared_f32))
    assert out1d.shape == (1, out_dim), out1d.shape
    assert jnp.allclose(out1d, ref[:1], atol=1e-5, rtol=1e-5), "mismatch (1-D input)"

    # Larger batch: 2 tiles -> exercises the parallel batch grid (both v7x TCs).
    obs2 = jax.random.normal(k_obs2, (300, in_dim), dtype=jnp.float32)
    out2 = jax.block_until_ready(feed_forward_nn_3(obs2, prepared_f32))
    ref2 = _reference(obs2, params)
    assert out2.shape == (300, out_dim), out2.shape
    assert jnp.allclose(out2, ref2, atol=1e-5, rtol=1e-5), "mismatch vs reference (tiled)"

    # bf16 matmul operands (MXU-native on v5e/v6e/v7x), f32 accumulation.
    out3 = jax.block_until_ready(feed_forward_nn_3(obs2, prepared_bf16))
    assert out3.shape == (300, out_dim), out3.shape
    assert jnp.allclose(out3, ref2, atol=1e-1, rtol=1e-1), "mismatch vs reference (bf16)"

    print("KERNEL_OK")
</pallas_src>

<mosaic_0001>
module attributes {stable_mosaic.version = 11 : i64} {
  func.func @_mlp3_kernel(%arg0: i32, %arg1: memref<8x16xf32, #tpu.memory_space<vmem>>, %arg2: memref<16x128xf32, #tpu.memory_space<vmem>>, %arg3: memref<1x128xf32, #tpu.memory_space<vmem>>, %arg4: memref<128x128xf32, #tpu.memory_space<vmem>>, %arg5: memref<1x128xf32, #tpu.memory_space<vmem>>, %arg6: memref<128x8xf32, #tpu.memory_space<vmem>>, %arg7: memref<1x8xf32, #tpu.memory_space<vmem>>, %arg8: memref<8x8xf32, #tpu.memory_space<vmem>>) attributes {dimension_semantics = [#tpu.dimension_semantics<parallel>], iteration_bounds = array<i64: 1>, scalar_prefetch = 0 : i64, scratch_operands = 0 : i64, tpu.core_type = #tpu.core_type<tc>, window_params = [{transform_indices = @transform_0, window_bounds = array<i64: 8, 16>}, {pipeline_mode = #tpu.pipeline_mode<synchronous>, transform_indices = @transform_1, window_bounds = array<i64: 16, 128>}, {pipeline_mode = #tpu.pipeline_mode<synchronous>, transform_indices = @transform_2, window_bounds = array<i64: 1, 128>}, {pipeline_mode = #tpu.pipeline_mode<synchronous>, transform_indices = @transform_3, window_bounds = array<i64: 128, 128>}, {pipeline_mode = #tpu.pipeline_mode<synchronous>, transform_indices = @transform_4, window_bounds = array<i64: 1, 128>}, {pipeline_mode = #tpu.pipeline_mode<synchronous>, transform_indices = @transform_5, window_bounds = array<i64: 128, 8>}, {pipeline_mode = #tpu.pipeline_mode<synchronous>, transform_indices = @transform_6, window_bounds = array<i64: 1, 8>}, {transform_indices = @transform_7, window_bounds = array<i64: 8, 8>}]} {
    %c0 = arith.constant 0 : index
    %c0_0 = arith.constant 0 : index
    %0 = vector.load %arg1[%c0, %c0_0] : memref<8x16xf32, #tpu.memory_space<vmem>>, vector<8x16xf32>
    %c0_1 = arith.constant 0 : index
    %c0_2 = arith.constant 0 : index
    %1 = vector.load %arg2[%c0_1, %c0_2] : memref<16x128xf32, #tpu.memory_space<vmem>>, vector<16x128xf32>
    %c0_3 = arith.constant 0 : index
    %c0_4 = arith.constant 0 : index
    %2 = vector.load %arg4[%c0_3, %c0_4] : memref<128x128xf32, #tpu.memory_space<vmem>>, vector<128x128xf32>
    %c0_5 = arith.constant 0 : index
    %c0_6 = arith.constant 0 : index
    %3 = vector.load %arg6[%c0_5, %c0_6] : memref<128x8xf32, #tpu.memory_space<vmem>>, vector<128x8xf32>
    %c0_7 = arith.constant 0 : index
    %c0_8 = arith.constant 0 : index
    %4 = vector.load %arg3[%c0_7, %c0_8] : memref<1x128xf32, #tpu.memory_space<vmem>>, vector<1x128xf32>
    %c0_9 = arith.constant 0 : index
    %c0_10 = arith.constant 0 : index
    %5 = vector.load %arg5[%c0_9, %c0_10] : memref<1x128xf32, #tpu.memory_space<vmem>>, vector<1x128xf32>
    %c0_11 = arith.constant 0 : index
    %c0_12 = arith.constant 0 : index
    %6 = vector.load %arg7[%c0_11, %c0_12] : memref<1x8xf32, #tpu.memory_space<vmem>>, vector<1x8xf32>
    %cst = arith.constant dense<0.000000e+00> : vector<8x128xf32>
    %7 = tpu.matmul %0, %1, %cst {dimension_numbers = #tpu.dot_dimension_numbers<[1], [0], [0], [1], [0, 0, 1, 1], [], []>} : vector<8x16xf32>, vector<16x128xf32>, vector<8x128xf32> -> vector<8x128xf32>
    %8 = vector.broadcast %4 : vector<1x128xf32> to vector<8x128xf32>
    %9 = arith.addf %7, %8 : vector<8x128xf32>
    %cst_13 = arith.constant 0.000000e+00 : f32
    %10 = vector.broadcast %cst_13 : f32 to vector<8x128xf32>
    %11 = arith.maximumf %9, %10 : vector<8x128xf32>
    %cst_14 = arith.constant dense<0.000000e+00> : vector<8x128xf32>
    %12 = tpu.matmul %11, %2, %cst_14 {dimension_numbers = #tpu.dot_dimension_numbers<[1], [0], [0], [1], [0, 0, 1, 1], [], []>} : vector<8x128xf32>, vector<128x128xf32>, vector<8x128xf32> -> vector<8x128xf32>
    %13 = vector.broadcast %5 : vector<1x128xf32> to vector<8x128xf32>
    %14 = arith.addf %12, %13 : vector<8x128xf32>
    %cst_15 = arith.constant 0.000000e+00 : f32
    %15 = vector.broadcast %cst_15 : f32 to vector<8x128xf32>
    %16 = arith.maximumf %14, %15 : vector<8x128xf32>
    %cst_16 = arith.constant dense<0.000000e+00> : vector<8x8xf32>
    %17 = tpu.matmul %16, %3, %cst_16 {dimension_numbers = #tpu.dot_dimension_numbers<[1], [0], [0], [1], [0, 0, 1, 1], [], []>} : vector<8x128xf32>, vector<128x8xf32>, vector<8x8xf32> -> vector<8x8xf32>
    %18 = vector.broadcast %6 : vector<1x8xf32> to vector<8x8xf32>
    %19 = arith.addf %17, %18 : vector<8x8xf32>
    %c0_17 = arith.constant 0 : index
    %c0_18 = arith.constant 0 : index
    %20 = vector.load %arg8[%c0_17, %c0_18] : memref<8x8xf32, #tpu.memory_space<vmem>>, vector<8x8xf32>
    tpu.vector_store %arg8[%c0_17, %c0_18], %19 {strides = array<i32>} : memref<8x8xf32, #tpu.memory_space<vmem>>, vector<8x8xf32>,
    return
  }
  func.func @transform_0(%arg0: i32) -> (i32, i32) {
    %c0_i32 = arith.constant 0 : i32
    %c0_i32_0 = arith.constant 0 : i32
    return %arg0, %c0_i32 : i32, i32
  }
  func.func @transform_1(%arg0: i32) -> (i32, i32) {
    %c0_i32 = arith.constant 0 : i32
    %c0_i32_0 = arith.constant 0 : i32
    %c0_i32_1 = arith.constant 0 : i32
    return %c0_i32, %c0_i32_0 : i32, i32
  }
  func.func @transform_2(%arg0: i32) -> (i32, i32) {
    %c0_i32 = arith.constant 0 : i32
    %c0_i32_0 = arith.constant 0 : i32
    %c0_i32_1 = arith.constant 0 : i32
    return %c0_i32, %c0_i32_0 : i32, i32
  }
  func.func @transform_3(%arg0: i32) -> (i32, i32) {
    %c0_i32 = arith.constant 0 : i32
    %c0_i32_0 = arith.constant 0 : i32
    %c0_i32_1 = arith.constant 0 : i32
    return %c0_i32, %c0_i32_0 : i32, i32
  }
  func.func @transform_4(%arg0: i32) -> (i32, i32) {
    %c0_i32 = arith.constant 0 : i32
    %c0_i32_0 = arith.constant 0 : i32
    %c0_i32_1 = arith.constant 0 : i32
    return %c0_i32, %c0_i32_0 : i32, i32
  }
  func.func @transform_5(%arg0: i32) -> (i32, i32) {
    %c0_i32 = arith.constant 0 : i32
    %c0_i32_0 = arith.constant 0 : i32
    %c0_i32_1 = arith.constant 0 : i32
    return %c0_i32, %c0_i32_0 : i32, i32
  }
  func.func @transform_6(%arg0: i32) -> (i32, i32) {
    %c0_i32 = arith.constant 0 : i32
    %c0_i32_0 = arith.constant 0 : i32
    %c0_i32_1 = arith.constant 0 : i32
    return %c0_i32, %c0_i32_0 : i32, i32
  }
  func.func @transform_7(%arg0: i32) -> (i32, i32) {
    %c0_i32 = arith.constant 0 : i32
    %c0_i32_0 = arith.constant 0 : i32
    return %arg0, %c0_i32 : i32, i32
  }
}

</mosaic_0001>

<llo_original>
// kernel: feed_forward_nn_3.1
$region0: #{feed_forward_nn_3.1}
  #allocation0 [shape = 'u32[]', space=smem, size = 0x4, offset = 0x4, fixed_abs, tag = 'smem constant byte address 0x4 - core index']
  #allocation1 [shape = 'u32[144,128]{1,0:T(1,128)}', space=vmem, size = 0x12000, scoped, tag = 'internal scratch']
  %s0 = inlined_call_operand.vmem [shape: f32[8,16], index: 0, kind: input, shape index: {}]
  %s1 = inlined_call_operand.vmem [shape: f32[16,128], index: 1, kind: input, shape index: {}]
  %s2 = inlined_call_operand.vmem [shape: f32[1,128], index: 2, kind: input, shape index: {}]
  %s3 = inlined_call_operand.vmem [shape: f32[128,128], index: 3, kind: input, shape index: {}]
  %s4 = inlined_call_operand.vmem [shape: f32[1,128], index: 4, kind: input, shape index: {}]
  %s5 = inlined_call_operand.vmem [shape: f32[128,8], index: 5, kind: input, shape index: {}]
  %s6 = inlined_call_operand.vmem [shape: f32[1,8], index: 6, kind: input, shape index: {}]
  %s7 = inlined_call_operand.vmem [shape: f32[8,8], index: 7, kind: output, shape index: {}]
  %s8 = sld [smem:[#allocation0]]
  $region38: #{feed_forward_nn_3.1} parent=0
    _
  %s10 = ssub.s32 1, %s8
  %s11 = scalar_select 0, %s10, %s8
  // Predicated region
  $region2: #{feed_forward_nn_3.1} parent=0 // pred_check
    _
  $region3: #{feed_forward_nn_3.1} parent=0 // pred_check_branch
    %13 = sbr.rel (0) target = $region5
  $region4: #{feed_forward_nn_3.1} parent=0 // pred_region
    _
  $region5: #{feed_forward_nn_3.1} parent=0 // pred_fallthru
    _
  // Predicated region
  $region6: #{feed_forward_nn_3.1} parent=0 // pred_check
    _
  $region7: #{feed_forward_nn_3.1} parent=0 // pred_check_branch
    %15 = sbr.rel (0) target = $region9
  $region8: #{feed_forward_nn_3.1} parent=0 // pred_region
    _
  $region9: #{feed_forward_nn_3.1} parent=0 // pred_fallthru
    _
  // Predicated region
  $region10: #{feed_forward_nn_3.1} parent=0 // pred_check
    _
  $region11: #{feed_forward_nn_3.1} parent=0 // pred_check_branch
    %17 = sbr.rel (0) target = $region13
  $region12: #{feed_forward_nn_3.1} parent=0 // pred_region
    _
  $region13: #{feed_forward_nn_3.1} parent=0 // pred_fallthru
    _
  // Predicated region
  $region14: #{feed_forward_nn_3.1} parent=0 // pred_check
    _
  $region15: #{feed_forward_nn_3.1} parent=0 // pred_check_branch
    %19 = sbr.rel (0) target = $region17
  $region16: #{feed_forward_nn_3.1} parent=0 // pred_region
    _
  $region17: #{feed_forward_nn_3.1} parent=0 // pred_fallthru
    _
  // Predicated region
  $region18: #{feed_forward_nn_3.1} parent=0 // pred_check
    _
  $region19: #{feed_forward_nn_3.1} parent=0 // pred_check_branch
    %21 = sbr.rel (0) target = $region21
  $region20: #{feed_forward_nn_3.1} parent=0 // pred_region
    _
  $region21: #{feed_forward_nn_3.1} parent=0 // pred_fallthru
    _
  // Predicated region
  $region22: #{feed_forward_nn_3.1} parent=0 // pred_check
    _
  $region23: #{feed_forward_nn_3.1} parent=0 // pred_check_branch
    %23 = sbr.rel (0) target = $region25
  $region24: #{feed_forward_nn_3.1} parent=0 // pred_region
    _
  $region25: #{feed_forward_nn_3.1} parent=0 // pred_fallthru
    _
  // Predicated region
  $region26: #{feed_forward_nn_3.1} parent=0 // pred_check
    _
  $region27: #{feed_forward_nn_3.1} parent=0 // pred_check_branch
    %25 = sbr.rel (0) target = $region29
  $region28: #{feed_forward_nn_3.1} parent=0 // pred_region
    _
  $region29: #{feed_forward_nn_3.1} parent=0 // pred_fallthru
    _
  %v26 = vld [vmem:[%s0] sm:$0xff]
  %v27 = vld [vmem:[%s1] sm:$0xff]
  %v28 = vld [vmem:[%s1 + $0x8] sm:$0xff]
  %v29 = vld [vmem:[%s3] sm:$0xff]
  %v30 = vld [vmem:[%s3 + $0x8] sm:$0xff]
  %v31 = vld [vmem:[%s3 + $0x10] sm:$0xff]
  %v32 = vld [vmem:[%s3 + $0x18] sm:$0xff]
  %v33 = vld [vmem:[%s3 + $0x20] sm:$0xff]
  %v34 = vld [vmem:[%s3 + $0x28] sm:$0xff]
  %v35 = vld [vmem:[%s3 + $0x30] sm:$0xff]
  %v36 = vld [vmem:[%s3 + $0x38] sm:$0xff]
  %v37 = vld [vmem:[%s3 + $0x40] sm:$0xff]
  %v38 = vld [vmem:[%s3 + $0x48] sm:$0xff]
  %v39 = vld [vmem:[%s3 + $0x50] sm:$0xff]
  %v40 = vld [vmem:[%s3 + $0x58] sm:$0xff]
  %v41 = vld [vmem:[%s3 + $0x60] sm:$0xff]
  %v42 = vld [vmem:[%s3 + $0x68] sm:$0xff]
  %v43 = vld [vmem:[%s3 + $0x70] sm:$0xff]
  %v44 = vld [vmem:[%s3 + $0x78] sm:$0xff]
  %v45 = vld [vmem:[%s5] sm:$0xff]
  %v46 = vld [vmem:[%s5 + $0x8] sm:$0xff]
  %v47 = vld [vmem:[%s5 + $0x10] sm:$0xff]
  %v48 = vld [vmem:[%s5 + $0x18] sm:$0xff]
  %v49 = vld [vmem:[%s5 + $0x20] sm:$0xff]
  %v50 = vld [vmem:[%s5 + $0x28] sm:$0xff]
  %v51 = vld [vmem:[%s5 + $0x30] sm:$0xff]
  %v52 = vld [vmem:[%s5 + $0x38] sm:$0xff]
  %v53 = vld [vmem:[%s5 + $0x40] sm:$0xff]
  %v54 = vld [vmem:[%s5 + $0x48] sm:$0xff]
  %v55 = vld [vmem:[%s5 + $0x50] sm:$0xff]
  %v56 = vld [vmem:[%s5 + $0x58] sm:$0xff]
  %v57 = vld [vmem:[%s5 + $0x60] sm:$0xff]
  %v58 = vld [vmem:[%s5 + $0x68] sm:$0xff]
  %v59 = vld [vmem:[%s5 + $0x70] sm:$0xff]
  %v60 = vld [vmem:[%s5 + $0x78] sm:$0xff]
  %v61 = vld [vmem:[%s2] sm:$0x1]
  %v62 = vld [vmem:[%s4] sm:$0x1]
  %v63 = vld [vmem:[%s6] sm:$0x1]
  %v65 = vlaneseq
  %v66 = vshrl.u32 %v65, 7
  %v67 = vsub.s32 0, %v66
  %v68 = vrot.slane %v61, %v67
  %vm70 = vcmask 130048
  %v72 = vsel %vm70, %v26, 0
  %74 = vmatprep.subr.mxu0 0.0
  %75 = vmatpush1.msra.mxu0 0.0
  %76 = vmatprep.subr.mxu0 0.0
  %77 = vmatpush1.msra.mxu0 0.0
  %78 = vmatprep.subr.mxu0 0.0
  %79 = vmatpush1.msra.mxu0 0.0
  %80 = vmatprep.subr.mxu0 0.0
  %81 = vmatpush1.msra.mxu0 0.0
  %82 = vmatprep.subr.mxu0 0.0
  %83 = vmatpush1.msra.mxu0 0.0
  %84 = vmatprep.subr.mxu0 0.0
  %85 = vmatpush1.msra.mxu0 0.0
  %86 = vmatprep.subr.mxu0 0.0
  %87 = vmatpush1.msra.mxu0 0.0
  %88 = vmatprep.subr.mxu0 0.0
  %89 = vmatpush1.msra.mxu0 0.0
  %90 = vmatprep.subr.mxu0 0.0
  %91 = vmatpush1.msra.mxu0 0.0
  %92 = vmatprep.subr.mxu0 0.0
  %93 = vmatpush1.msra.mxu0 0.0
  %94 = vmatprep.subr.mxu0 0.0
  %95 = vmatpush1.msra.mxu0 0.0
  %96 = vmatprep.subr.mxu0 0.0
  %97 = vmatpush1.msra.mxu0 0.0
  %98 = vmatprep.subr.mxu0 0.0
  %99 = vmatpush1.msra.mxu0 0.0
  %100 = vmatprep.subr.mxu0 0.0
  %101 = vmatpush1.msra.mxu0 0.0
  %102 = vmatprep.subr.mxu0 0.0
  %103 = vmatpush1.msra.mxu0 %v28
  %104 = vmatprep.subr.mxu0 0.0
  %105 = vmatpush1.msra.mxu0 %v27
  %106 = vmatprep.subr.mxu0 0.0
  %107 = vmatpush2.msra.mxu0 0.0
  %108 = vmatprep.subr.mxu0 0.0
  %109 = vmatpush2.msra.mxu0 0.0
  %110 = vmatprep.subr.mxu0 0.0
  %111 = vmatpush2.msra.mxu0 0.0
  %112 = vmatprep.subr.mxu0 0.0
  %113 = vmatpush2.msra.mxu0 0.0
  %114 = vmatprep.subr.mxu0 0.0
  %115 = vmatpush2.msra.mxu0 0.0
  %116 = vmatprep.subr.mxu0 0.0
  %117 = vmatpush2.msra.mxu0 0.0
  %118 = vmatprep.subr.mxu0 0.0
  %119 = vmatpush2.msra.mxu0 0.0
  %120 = vmatprep.subr.mxu0 0.0
  %121 = vmatpush2.msra.mxu0 0.0
  %122 = vmatprep.subr.mxu0 0.0
  %123 = vmatpush2.msra.mxu0 0.0
  %124 = vmatprep.subr.mxu0 0.0
  %125 = vmatpush2.msra.mxu0 0.0
  %126 = vmatprep.subr.mxu0 0.0
  %127 = vmatpush2.msra.mxu0 0.0
  %128 = vmatprep.subr.mxu0 0.0
  %129 = vmatpush2.msra.mxu0 0.0
  %130 = vmatprep.subr.mxu0 0.0
  %131 = vmatpush2.msra.mxu0 0.0
  %132 = vmatprep.subr.mxu0 0.0
  %133 = vmatpush2.msra.mxu0 0.0
  %134 = vmatprep.subr.mxu0 0.0
  %135 = vmatpush2.msra.mxu0 0.0
  %136 = vmatprep.subr.mxu0 0.0
  %137 = vmatpush2.msra.mxu0 0.0
  %138 = vmatprep.mubr.f32.mxu0 0.0
  %139 = vmatmul.mubr.f32.gmra.mxu0 %v72
  %v140 = vpop.f32.mrf.mxu0
  %v141 = vadd.f32 %v68, %v140
  %v142 = vpop.f32.mrf.mxu0
  %143 = vdwg.mxu0
  %v144 = vmax.f32 %v141, 0.0
  %v146 = vlaneseq
  %v147 = vshrl.u32 %v146, 7
  %v148 = vsub.s32 0, %v147
  %v149 = vrot.slane %v62, %v148
  %151 = vmatprep.subr.mxu0 0.0
  %152 = vmatpush1.msra.mxu0 %v44
  %153 = vmatprep.subr.mxu0 0.0
  %154 = vmatpush1.msra.mxu0 %v43
  %155 = vmatprep.subr.mxu0 0.0
  %156 = vmatpush1.msra.mxu0 %v42
  %157 = vmatprep.subr.mxu0 0.0
  %158 = vmatpush1.msra.mxu0 %v41
  %159 = vmatprep.subr.mxu0 0.0
  %160 = vmatpush1.msra.mxu0 %v40
  %161 = vmatprep.subr.mxu0 0.0
  %162 = vmatpush1.msra.mxu0 %v39
  %163 = vmatprep.subr.mxu0 0.0
  %164 = vmatpush1.msra.mxu0 %v38
  %165 = vmatprep.subr.mxu0 0.0
  %166 = vmatpush1.msra.mxu0 %v37
  %167 = vmatprep.subr.mxu0 0.0
  %168 = vmatpush1.msra.mxu0 %v36
  %169 = vmatprep.subr.mxu0 0.0
  %170 = vmatpush1.msra.mxu0 %v35
  %171 = vmatprep.subr.mxu0 0.0
  %172 = vmatpush1.msra.mxu0 %v34
  %173 = vmatprep.subr.mxu0 0.0
  %174 = vmatpush1.msra.mxu0 %v33
  %175 = vmatprep.subr.mxu0 0.0
  %176 = vmatpush1.msra.mxu0 %v32
  %177 = vmatprep.subr.mxu0 0.0
  %178 = vmatpush1.msra.mxu0 %v31
  %179 = vmatprep.subr.mxu0 0.0
  %180 = vmatpush1.msra.mxu0 %v30
  %181 = vmatprep.subr.mxu0 0.0
  %182 = vmatpush1.msra.mxu0 %v29
  %183 = vmatprep.subr.mxu0 0.0
  %184 = vmatpush2.msra.mxu0 0.0
  %185 = vmatprep.subr.mxu0 0.0
  %186 = vmatpush2.msra.mxu0 0.0
  %187 = vmatprep.subr.mxu0 0.0
  %188 = vmatpush2.msra.mxu0 0.0
  %189 = vmatprep.subr.mxu0 0.0
  %190 = vmatpush2.msra.mxu0 0.0
  %191 = vmatprep.subr.mxu0 0.0
  %192 = vmatpush2.msra.mxu0 0.0
  %193 = vmatprep.subr.mxu0 0.0
  %194 = vmatpush2.msra.mxu0 0.0
  %195 = vmatprep.subr.mxu0 0.0
  %196 = vmatpush2.msra.mxu0 0.0
  %197 = vmatprep.subr.mxu0 0.0
  %198 = vmatpush2.msra.mxu0 0.0
  %199 = vmatprep.subr.mxu0 0.0
  %200 = vmatpush2.msra.mxu0 0.0
  %201 = vmatprep.subr.mxu0 0.0
  %202 = vmatpush2.msra.mxu0 0.0
  %203 = vmatprep.subr.mxu0 0.0
  %204 = vmatpush2.msra.mxu0 0.0
  %205 = vmatprep.subr.mxu0 0.0
  %206 = vmatpush2.msra.mxu0 0.0
  %207 = vmatprep.subr.mxu0 0.0
  %208 = vmatpush2.msra.mxu0 0.0
  %209 = vmatprep.subr.mxu0 0.0
  %210 = vmatpush2.msra.mxu0 0.0
  %211 = vmatprep.subr.mxu0 0.0
  %212 = vmatpush2.msra.mxu0 0.0
  %213 = vmatprep.subr.mxu0 0.0
  %214 = vmatpush2.msra.mxu0 0.0
  %215 = vmatprep.mubr.f32.mxu0 0.0
  %216 = vmatmul.mubr.f32.gmra.mxu0 %v144
  %v217 = vpop.f32.mrf.mxu0
  %v218 = vadd.f32 %v149, %v217
  %v219 = vpop.f32.mrf.mxu0
  %220 = vdwg.mxu0
  %v221 = vmax.f32 %v218, 0.0
  %v223 = vlaneseq
  %v224 = vshrl.u32 %v223, 7
  %v225 = vsub.s32 0, %v224
  %v226 = vrot.slane %v63, %v225
  %228 = vmatprep.subr.mxu0 0.0
  %229 = vmatpush1.msra.mxu0 %v60
  %230 = vmatprep.subr.mxu0 0.0
  %231 = vmatpush1.msra.mxu0 %v59
  %232 = vmatprep.subr.mxu0 0.0
  %233 = vmatpush1.msra.mxu0 %v58
  %234 = vmatprep.subr.mxu0 0.0
  %235 = vmatpush1.msra.mxu0 %v57
  %236 = vmatprep.subr.mxu0 0.0
  %237 = vmatpush1.msra.mxu0 %v56
  %238 = vmatprep.subr.mxu0 0.0
  %239 = vmatpush1.msra.mxu0 %v55
  %240 = vmatprep.subr.mxu0 0.0
  %241 = vmatpush1.msra.mxu0 %v54
  %242 = vmatprep.subr.mxu0 0.0
  %243 = vmatpush1.msra.mxu0 %v53
  %244 = vmatprep.subr.mxu0 0.0
  %245 = vmatpush1.msra.mxu0 %v52
  %246 = vmatprep.subr.mxu0 0.0
  %247 = vmatpush1.msra.mxu0 %v51
  %248 = vmatprep.subr.mxu0 0.0
  %249 = vmatpush1.msra.mxu0 %v50
  %250 = vmatprep.subr.mxu0 0.0
  %251 = vmatpush1.msra.mxu0 %v49
  %252 = vmatprep.subr.mxu0 0.0
  %253 = vmatpush1.msra.mxu0 %v48
  %254 = vmatprep.subr.mxu0 0.0
  %255 = vmatpush1.msra.mxu0 %v47
  %256 = vmatprep.subr.mxu0 0.0
  %257 = vmatpush1.msra.mxu0 %v46
  %258 = vmatprep.subr.mxu0 0.0
  %259 = vmatpush1.msra.mxu0 %v45
  %260 = vmatprep.subr.mxu0 0.0
  %261 = vmatpush2.msra.mxu0 0.0
  %262 = vmatprep.subr.mxu0 0.0
  %263 = vmatpush2.msra.mxu0 0.0
  %264 = vmatprep.subr.mxu0 0.0
  %265 = vmatpush2.msra.mxu0 0.0
  %266 = vmatprep.subr.mxu0 0.0
  %267 = vmatpush2.msra.mxu0 0.0
  %268 = vmatprep.subr.mxu0 0.0
  %269 = vmatpush2.msra.mxu0 0.0
  %270 = vmatprep.subr.mxu0 0.0
  %271 = vmatpush2.msra.mxu0 0.0
  %272 = vmatprep.subr.mxu0 0.0
  %273 = vmatpush2.msra.mxu0 0.0
  %274 = vmatprep.subr.mxu0 0.0
  %275 = vmatpush2.msra.mxu0 0.0
  %276 = vmatprep.subr.mxu0 0.0
  %277 = vmatpush2.msra.mxu0 0.0
  %278 = vmatprep.subr.mxu0 0.0
  %279 = vmatpush2.msra.mxu0 0.0
  %280 = vmatprep.subr.mxu0 0.0
  %281 = vmatpush2.msra.mxu0 0.0
  %282 = vmatprep.subr.mxu0 0.0
  %283 = vmatpush2.msra.mxu0 0.0
  %284 = vmatprep.subr.mxu0 0.0
  %285 = vmatpush2.msra.mxu0 0.0
  %286 = vmatprep.subr.mxu0 0.0
  %287 = vmatpush2.msra.mxu0 0.0
  %288 = vmatprep.subr.mxu0 0.0
  %289 = vmatpush2.msra.mxu0 0.0
  %290 = vmatprep.subr.mxu0 0.0
  %291 = vmatpush2.msra.mxu0 0.0
  %292 = vmatprep.mubr.f32.mxu0 0.0
  %293 = vmatmul.mubr.f32.gmra.mxu0 %v221
  %v294 = vpop.f32.mrf.mxu0
  %v295 = vadd.f32 %v226, %v294
  %v296 = vpop.f32.mrf.mxu0
  %297 = vdwg.mxu0
  %vm298 = vcmask 64512
  %299 = vst.msk [vmem:[%s7] sm:$0xff] %vm298, %v295
  // Predicated region
  $region30: #{feed_forward_nn_3.1} parent=0 // pred_check
    _
  $region31: #{feed_forward_nn_3.1} parent=0 // pred_check_branch
    %301 = sbr.rel (0) target = $region33
  $region32: #{feed_forward_nn_3.1} parent=0 // pred_region
    _
  $region33: #{feed_forward_nn_3.1} parent=0 // pred_fallthru
    _
  // Predicated region
  $region34: #{feed_forward_nn_3.1} parent=0 // pred_check
    _
  $region35: #{feed_forward_nn_3.1} parent=0 // pred_check_branch
    %303 = sbr.rel (0) target = $region37
  $region36: #{feed_forward_nn_3.1} parent=0 // pred_region
    _
  $region37: #{feed_forward_nn_3.1} parent=0 // pred_fallthru
    _

</llo_original>
